<compile_context>
chip_gen: v5e
topology: v5e:2x2
jax: 0.10.0
libtpu: 0.0.40
codegen_flags: <defaults>
</compile_context>

<pallas_src>
import math

import jax
import jax.numpy as jnp
from jax import lax
from jax.experimental import pallas as pl
from jax.experimental.pallas import tpu as pltpu


def _head_kernel(x_ref, wq_ref, wk_ref, wv_ref, o_ref):
    # One batch element per grid step (grid axis 0 == batch, "parallel").
    #   x_ref:  (T, C)  bf16
    #   w*_ref: (C, H)  bf16 (1/sqrt(H) already folded into wq)
    #   o_ref:  (T, H)  f32
    x = x_ref[...]

    # Three independent projections: bf16 MXU operands, f32 accumulation.
    q = jnp.dot(x, wq_ref[...], preferred_element_type=jnp.float32)   # (T, H) f32
    k = jnp.dot(x, wk_ref[...], preferred_element_type=jnp.float32)   # (T, H) f32
    v = jnp.dot(x, wv_ref[...], preferred_element_type=jnp.float32)   # (T, H) f32

    # scores = q @ k^T without materializing a transpose: contract last dims.
    s = lax.dot_general(q.astype(jnp.bfloat16), k.astype(jnp.bfloat16),
                        dimension_numbers=(((1,), (1,)), ((), ())),
                        preferred_element_type=jnp.float32)           # (T, T) f32

    # Numerically-stable softmax; elementwise math in f32.  Normalization is
    # applied after the PV matmul (see rescale below).
    m = jnp.max(s, axis=-1, keepdims=True)                            # (T, 1) f32
    e = jnp.exp(s - m)                                                 # (T, T) f32
    denom = jnp.sum(e, axis=-1, keepdims=True)                         # (T, 1) f32

    # Unnormalized PV matmul with bf16 MXU operands, then one (T, H) rescale via
    # the EUP approximate reciprocal (frees the VPU slot).
    ev = jnp.dot(e.astype(jnp.bfloat16), v.astype(jnp.bfloat16),
                 preferred_element_type=jnp.float32)                   # (T, H) f32
    o = ev * pl.reciprocal(denom, approx=True)

    # Single slab store per grid step.
    o_ref[...] = o.astype(o_ref.dtype)


@jax.jit
def head_forward(x, wq, wk, wv):
    """x: (B, T, C); wq/wk/wv: (C, H). Returns (B, T, H) f32."""
    B, T, C = x.shape
    H = wq.shape[1]

    # Fold the 1/sqrt(head_size) score scaling into wq once and cast MXU
    # operands to bf16.  Under jit these are tiny fused ops, not per-call
    # HBM materializations.
    scale = 1.0 / math.sqrt(float(H))
    x_bf = x.astype(jnp.bfloat16)
    wq_bf = (wq * scale).astype(jnp.bfloat16)
    wk_bf = wk.astype(jnp.bfloat16)
    wv_bf = wv.astype(jnp.bfloat16)

    return pl.pallas_call(
        _head_kernel,
        out_shape=jax.ShapeDtypeStruct((B, T, H), jnp.float32),
        grid=(B,),
        in_specs=[
            pl.BlockSpec((None, T, C), lambda b: (b, 0, 0)),   # per-batch x tile
            pl.BlockSpec((C, H), lambda b: (0, 0)),            # wq (resident)
            pl.BlockSpec((C, H), lambda b: (0, 0)),            # wk (resident)
            pl.BlockSpec((C, H), lambda b: (0, 0)),            # wv (resident)
        ],
        out_specs=pl.BlockSpec((None, T, H), lambda b: (b, 0, 0)),
        compiler_params=pltpu.CompilerParams(
            # Batch steps are independent → "parallel" (v7x megacore sharding).
            dimension_semantics=("parallel",),
        ),
    )(x_bf, wq_bf, wk_bf, wv_bf)


def _reference(x, wq, wk, wv):
    q = x @ wq
    k = x @ wk
    v = x @ wv
    H = wq.shape[1]
    scores = (q @ jnp.swapaxes(k, -2, -1)) / math.sqrt(float(H))
    probs = jax.nn.softmax(scores, axis=-1)
    return probs @ v


if __name__ == "__main__":
    # Small shapes consistent with the module: batch=2, seq=8, n_embd=32, head_size=16.
    B, T, C, H = 2, 8, 32, 16

    key = jax.random.PRNGKey(0)
    kx, kq, kk, kv = jax.random.split(key, 4)

    x = jax.random.normal(kx, (B, T, C), dtype=jnp.float32)

    # kaiming_normal_-style init: std = sqrt(2 / fan_in); PyTorch fan_in of a
    # (n_embd, head_size) tensor is head_size.
    std = math.sqrt(2.0 / H)
    wq = jax.random.normal(kq, (C, H), dtype=jnp.float32) * std
    wk = jax.random.normal(kk, (C, H), dtype=jnp.float32) * std
    wv = jax.random.normal(kv, (C, H), dtype=jnp.float32) * std

    out = jax.block_until_ready(head_forward(x, wq, wk, wv))

    ref = _reference(x, wq, wk, wv)
    assert out.shape == (B, T, H)
    # Tolerance accounts for bf16 MXU operands (q/k/e/v rounding amplified
    # through exp in the softmax) and the EUP approximate reciprocal in the
    # softmax denominator; the f32 reference above is exact.
    assert jnp.allclose(out, ref, atol=1e-1, rtol=5e-2), (
        float(jnp.max(jnp.abs(out - ref))))

    print("KERNEL_OK")
</pallas_src>

<mosaic_0001>
module attributes {stable_mosaic.version = 11 : i64} {
  func.func @_head_kernel(%arg0: i32, %arg1: memref<1x8x32xbf16, #tpu.memory_space<vmem>>, %arg2: memref<32x16xbf16, #tpu.memory_space<vmem>>, %arg3: memref<32x16xbf16, #tpu.memory_space<vmem>>, %arg4: memref<32x16xbf16, #tpu.memory_space<vmem>>, %arg5: memref<1x8x16xf32, #tpu.memory_space<vmem>>) attributes {dimension_semantics = [#tpu.dimension_semantics<parallel>], iteration_bounds = array<i64: 2>, scalar_prefetch = 0 : i64, scratch_operands = 0 : i64, tpu.core_type = #tpu.core_type<tc>, window_params = [{transform_indices = @transform_0, window_bounds = array<i64: 1, 8, 32>}, {pipeline_mode = #tpu.pipeline_mode<synchronous>, transform_indices = @transform_1, window_bounds = array<i64: 32, 16>}, {pipeline_mode = #tpu.pipeline_mode<synchronous>, transform_indices = @transform_2, window_bounds = array<i64: 32, 16>}, {pipeline_mode = #tpu.pipeline_mode<synchronous>, transform_indices = @transform_3, window_bounds = array<i64: 32, 16>}, {transform_indices = @transform_4, window_bounds = array<i64: 1, 8, 16>}]} {
    %c0 = arith.constant 0 : index
    %c0_0 = arith.constant 0 : index
    %c0_1 = arith.constant 0 : index
    %0 = vector.load %arg1[%c0, %c0_0, %c0_1] : memref<1x8x32xbf16, #tpu.memory_space<vmem>>, vector<1x8x32xbf16>
    %1 = vector.shape_cast %0 : vector<1x8x32xbf16> to vector<8x32xbf16>
    %c0_2 = arith.constant 0 : index
    %c0_3 = arith.constant 0 : index
    %2 = vector.load %arg2[%c0_2, %c0_3] : memref<32x16xbf16, #tpu.memory_space<vmem>>, vector<32x16xbf16>
    %cst = arith.constant dense<0.000000e+00> : vector<8x16xf32>
    %3 = tpu.matmul %1, %2, %cst {dimension_numbers = #tpu.dot_dimension_numbers<[1], [0], [0], [1], [0, 0, 1, 1], [], []>} : vector<8x32xbf16>, vector<32x16xbf16>, vector<8x16xf32> -> vector<8x16xf32>
    %c0_4 = arith.constant 0 : index
    %c0_5 = arith.constant 0 : index
    %4 = vector.load %arg3[%c0_4, %c0_5] : memref<32x16xbf16, #tpu.memory_space<vmem>>, vector<32x16xbf16>
    %cst_6 = arith.constant dense<0.000000e+00> : vector<8x16xf32>
    %5 = tpu.matmul %1, %4, %cst_6 {dimension_numbers = #tpu.dot_dimension_numbers<[1], [0], [0], [1], [0, 0, 1, 1], [], []>} : vector<8x32xbf16>, vector<32x16xbf16>, vector<8x16xf32> -> vector<8x16xf32>
    %c0_7 = arith.constant 0 : index
    %c0_8 = arith.constant 0 : index
    %6 = vector.load %arg4[%c0_7, %c0_8] : memref<32x16xbf16, #tpu.memory_space<vmem>>, vector<32x16xbf16>
    %cst_9 = arith.constant dense<0.000000e+00> : vector<8x16xf32>
    %7 = tpu.matmul %1, %6, %cst_9 {dimension_numbers = #tpu.dot_dimension_numbers<[1], [0], [0], [1], [0, 0, 1, 1], [], []>} : vector<8x32xbf16>, vector<32x16xbf16>, vector<8x16xf32> -> vector<8x16xf32>
    %8 = arith.truncf %3 : vector<8x16xf32> to vector<8x16xbf16>
    %9 = arith.truncf %5 : vector<8x16xf32> to vector<8x16xbf16>
    %cst_10 = arith.constant dense<0.000000e+00> : vector<8x8xf32>
    %10 = tpu.matmul %8, %9, %cst_10 {dimension_numbers = #tpu.dot_dimension_numbers<[1], [1], [0], [0], [0, 0, 1, 0], [], []>} : vector<8x16xbf16>, vector<8x16xbf16>, vector<8x8xf32> -> vector<8x8xf32>
    %cst_11 = arith.constant dense<0xFF800000> : vector<8xf32>
    %11 = vector.multi_reduction <maximumf>, %10, %cst_11 [1] : vector<8x8xf32> to vector<8xf32>
    %12 = vector.shape_cast %11 : vector<8xf32> to vector<8x1xf32>
    %13 = vector.broadcast %12 : vector<8x1xf32> to vector<8x8xf32>
    %14 = arith.subf %10, %13 : vector<8x8xf32>
    %15 = math.exp %14 : vector<8x8xf32>
    %cst_12 = arith.constant dense<0.000000e+00> : vector<8xf32>
    %16 = vector.multi_reduction <add>, %15, %cst_12 [1] : vector<8x8xf32> to vector<8xf32>
    %17 = vector.shape_cast %16 : vector<8xf32> to vector<8x1xf32>
    %18 = arith.truncf %15 : vector<8x8xf32> to vector<8x8xbf16>
    %19 = arith.truncf %7 : vector<8x16xf32> to vector<8x16xbf16>
    %cst_13 = arith.constant dense<0.000000e+00> : vector<8x16xf32>
    %20 = tpu.matmul %18, %19, %cst_13 {dimension_numbers = #tpu.dot_dimension_numbers<[1], [0], [0], [1], [0, 0, 1, 1], [], []>} : vector<8x8xbf16>, vector<8x16xbf16>, vector<8x16xf32> -> vector<8x16xf32>
    %21 = tpu.reciprocal %17 {approx = true} : vector<8x1xf32> -> vector<8x1xf32>
    %22 = vector.broadcast %21 : vector<8x1xf32> to vector<8x16xf32>
    %23 = arith.mulf %20, %22 : vector<8x16xf32>
    %c0_14 = arith.constant 0 : index
    %c0_15 = arith.constant 0 : index
    %c0_16 = arith.constant 0 : index
    %24 = vector.load %arg5[%c0_14, %c0_15, %c0_16] : memref<1x8x16xf32, #tpu.memory_space<vmem>>, vector<1x8x16xf32>
    %25 = vector.shape_cast %24 : vector<1x8x16xf32> to vector<8x16xf32>
    %26 = vector.shape_cast %23 : vector<8x16xf32> to vector<1x8x16xf32>
    tpu.vector_store %arg5[%c0_14, %c0_15, %c0_16], %26 {strides = array<i32>} : memref<1x8x16xf32, #tpu.memory_space<vmem>>, vector<1x8x16xf32>,
    return
  }
  func.func @transform_0(%arg0: i32) -> (i32, i32, i32) {
    %c0_i32 = arith.constant 0 : i32
    %c0_i32_0 = arith.constant 0 : i32
    %c0_i32_1 = arith.constant 0 : i32
    return %arg0, %c0_i32, %c0_i32_0 : i32, i32, i32
  }
  func.func @transform_1(%arg0: i32) -> (i32, i32) {
    %c0_i32 = arith.constant 0 : i32
    %c0_i32_0 = arith.constant 0 : i32
    %c0_i32_1 = arith.constant 0 : i32
    return %c0_i32, %c0_i32_0 : i32, i32
  }
  func.func @transform_2(%arg0: i32) -> (i32, i32) {
    %c0_i32 = arith.constant 0 : i32
    %c0_i32_0 = arith.constant 0 : i32
    %c0_i32_1 = arith.constant 0 : i32
    return %c0_i32, %c0_i32_0 : i32, i32
  }
  func.func @transform_3(%arg0: i32) -> (i32, i32) {
    %c0_i32 = arith.constant 0 : i32
    %c0_i32_0 = arith.constant 0 : i32
    %c0_i32_1 = arith.constant 0 : i32
    return %c0_i32, %c0_i32_0 : i32, i32
  }
  func.func @transform_4(%arg0: i32) -> (i32, i32, i32) {
    %c0_i32 = arith.constant 0 : i32
    %c0_i32_0 = arith.constant 0 : i32
    %c0_i32_1 = arith.constant 0 : i32
    return %arg0, %c0_i32, %c0_i32_0 : i32, i32, i32
  }
}

</mosaic_0001>

<llo_original>
// kernel: head_forward.1
$region0: #{head_forward.1}
  #allocation0 [shape = 'u32[]', space=smem, size = 0x4, offset = 0x4, fixed_abs, tag = 'smem constant byte address 0x4 - core index']
  #allocation1 [shape = 'u32[72,128]{1,0:T(1,128)}', space=vmem, size = 0x9000, scoped, tag = 'internal scratch']
  %s0 = inlined_call_operand.vmem [shape: bf16[2,8,32], index: 0, kind: input, shape index: {}]
  %s1 = inlined_call_operand.vmem [shape: bf16[32,16], index: 1, kind: input, shape index: {}]
  %s2 = inlined_call_operand.vmem [shape: bf16[32,16], index: 2, kind: input, shape index: {}]
  %s3 = inlined_call_operand.vmem [shape: bf16[32,16], index: 3, kind: input, shape index: {}]
  %s4 = inlined_call_operand.hbm [shape: f32[2,8,16], index: 4, kind: output, shape index: {}]
  %s5 = sld [smem:[#allocation0]]
  $region49: #{head_forward.1} parent=0
    _
  %s7 = ssub.s32 1, %s5
  %s8 = scalar_select 0, %s7, %s5
  $region1: #{head_forward.1} parent=0
    #allocation2 [shape = 'u8[8192]{0}', space=vmem, size = 0x2000, scoped, tag = 'output window, operand 0']
    #allocation3 [shape = 's32[2]{0}', space=sflag, size = 0x8, scoped, tag = 'scoped memory for head_forward.1']
    %9 = vsyncpa [#allocation3], 0
    %s10 = scalar_lea.sflag [#allocation3], 1
    %11 = vsyncpa %s10, 0
    loop: start=0, step=1, limit=4
    $region2: #{head_forward.1} parent=1 // loop_pre_header
      _
    $region3: #{head_forward.1} parent=1 // loop_header
      %s13 = sphi 0, %s17
      %p14 = scmp.ge.s32.totalorder %s13, 4
      %s23 = sphi 0, %s25
      %s26 = sphi 0, %s23
      %s27 = sphi 0, %s26
      %s43 = sphi 0, %s27
      %s47 = sphi 0, %s47
      %s49 = sphi 0, %s47
      %s50 = sphi 0, %s49
      %s64 = sphi 0, %s50
      %s68 = sphi 0, %s68
      %s70 = sphi 0, %s68
      %s71 = sphi 0, %s70
      %s85 = sphi 0, %s71
      %s89 = sphi 0, %s89
      %s91 = sphi 0, %s89
      %s92 = sphi 0, %s91
      %s106 = sphi 0, %s92
      %s112 = sphi 0, %s114
      %s115 = sphi 0, %s112
      %s116 = sphi 0, %s115
      %s132 = sphi 0, %s116
    $region4: #{head_forward.1} parent=1 // loop_header_branch
      %16 = sbr.rel (%p14) target = $region8
    $region5: #{head_forward.1} parent=1 // loop_body
      %s18 = ssub.s32 %s13, 1
      %s19 = ssub.s32 %s13, 2
      %s20 = sadd.s32 %s13, 1
      %s21 = ssub.s32 %s13, %s20
      %p22 = scmp.eq.s32.totalorder %s21, 0
      %s24 = sadd.s32 %s23, 1
      %s25 = scalar_select %p22, %s23, %s24
      %p28 = pneg %p22
      %p29 = scmp.eq.s32.totalorder %s13, 1
      %p30 = por %p28, %p29
      %p31 = scmp.ne.s32.totalorder %s23, %s26
      %p32 = scmp.eq.s32.totalorder %s13, 0
      %p33 = por %p31, %p32
      %p34 = scmp.ne.s32.totalorder %s23, %s26
      %p35 = scmp.eq.s32.totalorder %s18, 1
      %p36 = por %p34, %p35
      %p37 = scmp.ne.s32.totalorder %s26, %s27
      %p38 = scmp.eq.s32.totalorder %s18, 0
      %p39 = por %p37, %p38
      %p40 = scmp.ne.s32.totalorder %s26, %s27
      %p41 = scmp.eq.s32.totalorder %s19, 1
      %p42 = por %p40, %p41
      %p44 = scmp.ne.s32.totalorder %s27, %s43
      %p45 = scmp.eq.s32.totalorder %s19, 0
      %p46 = por %p44, %p45
      %s48 = sadd.s32 %s47, 1
      %p51 = scmp.eq.s32.totalorder %s13, 1
      %p52 = scmp.ne.s32.totalorder %s47, %s49
      %p53 = scmp.eq.s32.totalorder %s13, 0
      %p54 = por %p52, %p53
      %p55 = scmp.ne.s32.totalorder %s47, %s49
      %p56 = scmp.eq.s32.totalorder %s18, 1
      %p57 = por %p55, %p56
      %p58 = scmp.ne.s32.totalorder %s49, %s50
      %p59 = scmp.eq.s32.totalorder %s18, 0
      %p60 = por %p58, %p59
      %p61 = scmp.ne.s32.totalorder %s49, %s50
      %p62 = scmp.eq.s32.totalorder %s19, 1
      %p63 = por %p61, %p62
      %p65 = scmp.ne.s32.totalorder %s50, %s64
      %p66 = scmp.eq.s32.totalorder %s19, 0
      %p67 = por %p65, %p66
      %s69 = sadd.s32 %s68, 1
      %p72 = scmp.eq.s32.totalorder %s13, 1
      %p73 = scmp.ne.s32.totalorder %s68, %s70
      %p74 = scmp.eq.s32.totalorder %s13, 0
      %p75 = por %p73, %p74
      %p76 = scmp.ne.s32.totalorder %s68, %s70
      %p77 = scmp.eq.s32.totalorder %s18, 1
      %p78 = por %p76, %p77
      %p79 = scmp.ne.s32.totalorder %s70, %s71
      %p80 = scmp.eq.s32.totalorder %s18, 0
      %p81 = por %p79, %p80
      %p82 = scmp.ne.s32.totalorder %s70, %s71
      %p83 = scmp.eq.s32.totalorder %s19, 1
      %p84 = por %p82, %p83
      %p86 = scmp.ne.s32.totalorder %s71, %s85
      %p87 = scmp.eq.s32.totalorder %s19, 0
      %p88 = por %p86, %p87
      %s90 = sadd.s32 %s89, 1
      %p93 = scmp.eq.s32.totalorder %s13, 1
      %p94 = scmp.ne.s32.totalorder %s89, %s91
      %p95 = scmp.eq.s32.totalorder %s13, 0
      %p96 = por %p94, %p95
      %p97 = scmp.ne.s32.totalorder %s89, %s91
      %p98 = scmp.eq.s32.totalorder %s18, 1
      %p99 = por %p97, %p98
      %p100 = scmp.ne.s32.totalorder %s91, %s92
      %p101 = scmp.eq.s32.totalorder %s18, 0
      %p102 = por %p100, %p101
      %p103 = scmp.ne.s32.totalorder %s91, %s92
      %p104 = scmp.eq.s32.totalorder %s19, 1
      %p105 = por %p103, %p104
      %p107 = scmp.ne.s32.totalorder %s92, %s106
      %p108 = scmp.eq.s32.totalorder %s19, 0
      %p109 = por %p107, %p108
      %s110 = ssub.s32 %s13, %s20
      %p111 = scmp.eq.s32.totalorder %s110, 0
      %s113 = sadd.s32 %s112, 1
      %s114 = scalar_select %p111, %s112, %s113
      %p117 = pneg %p111
      %p118 = scmp.eq.s32.totalorder %s13, 1
      %p119 = por %p117, %p118
      %p120 = scmp.ne.s32.totalorder %s112, %s115
      %p121 = scmp.eq.s32.totalorder %s13, 0
      %p122 = por %p120, %p121
      %p123 = scmp.ne.s32.totalorder %s112, %s115
      %p124 = scmp.eq.s32.totalorder %s18, 1
      %p125 = por %p123, %p124
      %p126 = scmp.ne.s32.totalorder %s115, %s116
      %p127 = scmp.eq.s32.totalorder %s18, 0
      %p128 = por %p126, %p127
      %p129 = scmp.ne.s32.totalorder %s115, %s116
      %p130 = scmp.eq.s32.totalorder %s19, 1
      %p131 = por %p129, %p130
      %p133 = scmp.ne.s32.totalorder %s116, %s132
      %p134 = scmp.eq.s32.totalorder %s19, 0
      %p135 = por %p133, %p134
      %p136 = scmp.le.s32.totalorder 1, %s13
      %p137 = scmp.lt.s32.totalorder %s13, 3
      %p138 = pnand %p136, %p137
      %p139 = pneg %p138
      // Predicated region
      $region9: #{head_forward.1} parent=5 // pred_check
        _
      $region10: #{head_forward.1} parent=5 // pred_check_branch
        %141 = sbr.rel (%p138) target = $region12
      $region11: #{head_forward.1} parent=5 // pred_region
        %s142 = ssub.s32 %s13, 1
        // Predicated region
        $region13: #{head_forward.1} parent=11 // pred_check
          %p143 = pneg %p60
        $region14: #{head_forward.1} parent=11 // pred_check_branch
          %145 = sbr.rel (%p143) target = $region16
        $region15: #{head_forward.1} parent=11 // pred_region
          _
        $region16: #{head_forward.1} parent=11 // pred_fallthru
          _
        // Predicated region
        $region17: #{head_forward.1} parent=11 // pred_check
          %p146 = pneg %p81
        $region18: #{head_forward.1} parent=11 // pred_check_branch
          %148 = sbr.rel (%p146) target = $region20
        $region19: #{head_forward.1} parent=11 // pred_region
          _
        $region20: #{head_forward.1} parent=11 // pred_fallthru
          _
        // Predicated region
        $region21: #{head_forward.1} parent=11 // pred_check
          %p149 = pneg %p102
        $region22: #{head_forward.1} parent=11 // pred_check_branch
          %151 = sbr.rel (%p149) target = $region24
        $region23: #{head_forward.1} parent=11 // pred_region
          _
        $region24: #{head_forward.1} parent=11 // pred_fallthru
          _
      $region12: #{head_forward.1} parent=5 // pred_fallthru
        _
      %p152 = scmp.lt.s32.totalorder %s13, 2
      // Predicated region
      $region25: #{head_forward.1} parent=5 // pred_check
        %p153 = pneg %p152
      $region26: #{head_forward.1} parent=5 // pred_check_branch
        %155 = sbr.rel (%p153) target = $region28
      $region27: #{head_forward.1} parent=5 // pred_region
        // Predicated region
        $region29: #{head_forward.1} parent=27 // pred_check
          %p156 = pneg %p33
        $region30: #{head_forward.1} parent=27 // pred_check_branch
          %158 = sbr.rel (%p156) target = $region32
        $region31: #{head_forward.1} parent=27 // pred_region
          %p159 = scmp.lt.s32.totalorder %s13, 1
          %s160 = scalar_select %p159, %s13, 1
          %s161 = smul.addr %s160, 4
          %s162 = scalar_lea.vmem %s0, %s161
        $region32: #{head_forward.1} parent=27 // pred_fallthru
          _
      $region28: #{head_forward.1} parent=5 // pred_fallthru
        _
      %p163 = scmp.le.s32.totalorder 1, %s13
      %p164 = scmp.lt.s32.totalorder %s13, 3
      %p165 = pnand %p163, %p164
      %p166 = pneg %p165
      // Predicated region
      $region33: #{head_forward.1} parent=5 // pred_check
        _
      $region34: #{head_forward.1} parent=5 // pred_check_branch
        %168 = sbr.rel (%p165) target = $region36
      $region35: #{head_forward.1} parent=5 // pred_region
        %s169 = ssub.s32 %s13, 1
        %p170 = scmp.lt.s32.totalorder %s18, 1
        %s171 = scalar_select %p170, %s18, 1
        %s172 = smul.addr %s171, 4
        %s173 = scalar_lea.vmem %s0, %s172
        %p174 = pneg %p39
        %p175 = pneg %p36
        %p176 = pneg %p60
        %p177 = pneg %p57
        %p178 = pneg %p81
        %p179 = pneg %p78
        %p180 = pneg %p102
        %p181 = pneg %p99
        %p182 = pneg %p128
        %p183 = pneg %p125
        %s184 = sand.u32 %s115, 1
        %s185 = scalar_lea.sflag [#allocation3], %s184
        %s186 = sand.u32 %s115, 1
        %s187 = smul.addr %s186, 8
        %s188 = scalar_lea.vmem [#allocation2], %s187
        %p189 = scmp.lt.s32.totalorder %s18, 1
        %s190 = scalar_select %p189, %s18, 1
        %s191 = smul.addr %s190, 4
        %s192 = scalar_lea.vmem %s0, %s191
        %v194 = vld [vmem:[%s192] sm:$0xf]
        %v195 = vld [vmem:[%s1] sm:$0xf]
        %v196 = vld [vmem:[%s1 + $0x4] sm:$0xf]
        %v197 = vld [vmem:[%s1 + $0x8] sm:$0xf]
        %v198 = vld [vmem:[%s1 + $0xc] sm:$0xf]
        %v203 = vunpack.c.l.b16 %v195
        %v204 = vunpack.c.l.b16 %v196
        %v205 = vunpack.c.l.b16 %v197
        %v206 = vunpack.c.l.b16 %v198
        %v207 = vpack.c.b16 %v204, %v203
        %v208 = vpack.c.b16 %v206, %v205
        %vm211 = vcmask 261120
        %v213 = vsel %vm211, %v194, 0
        %215 = vmatpush.bf16.msra.mxu0 0
        %216 = vmatpush.bf16.msra.mxu0 0
        %217 = vmatpush.bf16.msra.mxu0 0
        %218 = vmatpush.bf16.msra.mxu0 0
        %219 = vmatpush.bf16.msra.mxu0 0
        %220 = vmatpush.bf16.msra.mxu0 0
        %221 = vmatpush.bf16.msra.mxu0 %v208
        %222 = vmatpush.bf16.msra.mxu0 %v207
        %223 = vmatmul.bf16.gmra.mxu0 %v213
        %v224 = vpop.f32.mrf.mxu0
        %v225 = vadd.f32 0.0, %v224
        %v226 = vpop.f32.mrf.mxu0
        %227 = vdwg.mxu0
        %v228 = vld [vmem:[%s2] sm:$0xf]
        %v229 = vld [vmem:[%s2 + $0x4] sm:$0xf]
        %v230 = vld [vmem:[%s2 + $0x8] sm:$0xf]
        %v231 = vld [vmem:[%s2 + $0xc] sm:$0xf]
        %v236 = vunpack.c.l.b16 %v228
        %v237 = vunpack.c.l.b16 %v229
        %v238 = vunpack.c.l.b16 %v230
        %v239 = vunpack.c.l.b16 %v231
        %v240 = vpack.c.b16 %v237, %v236
        %v241 = vpack.c.b16 %v239, %v238
        %244 = vmatpush.bf16.msra.mxu0 0
        %245 = vmatpush.bf16.msra.mxu0 0
        %246 = vmatpush.bf16.msra.mxu0 0
        %247 = vmatpush.bf16.msra.mxu0 0
        %248 = vmatpush.bf16.msra.mxu0 0
        %249 = vmatpush.bf16.msra.mxu0 0
        %250 = vmatpush.bf16.msra.mxu0 %v241
        %251 = vmatpush.bf16.msra.mxu0 %v240
        %252 = vmatmul.bf16.gmra.mxu0 %v213
        %v253 = vpop.f32.mrf.mxu0
        %v254 = vadd.f32 0.0, %v253
        %v255 = vpop.f32.mrf.mxu0
        %256 = vdwg.mxu0
        %v257 = vld [vmem:[%s3] sm:$0xf]
        %v258 = vld [vmem:[%s3 + $0x4] sm:$0xf]
        %v259 = vld [vmem:[%s3 + $0x8] sm:$0xf]
        %v260 = vld [vmem:[%s3 + $0xc] sm:$0xf]
        %v265 = vunpack.c.l.b16 %v257
        %v266 = vunpack.c.l.b16 %v258
        %v267 = vunpack.c.l.b16 %v259
        %v268 = vunpack.c.l.b16 %v260
        %v269 = vpack.c.b16 %v266, %v265
        %v270 = vpack.c.b16 %v268, %v267
        %273 = vmatpush.bf16.msra.mxu0 0
        %274 = vmatpush.bf16.msra.mxu0 0
        %275 = vmatpush.bf16.msra.mxu0 0
        %276 = vmatpush.bf16.msra.mxu0 0
        %277 = vmatpush.bf16.msra.mxu0 0
        %278 = vmatpush.bf16.msra.mxu0 0
        %279 = vmatpush.bf16.msra.mxu0 %v270
        %280 = vmatpush.bf16.msra.mxu0 %v269
        %281 = vmatmul.bf16.gmra.mxu0 %v213
        %v282 = vpop.f32.mrf.mxu0
        %v283 = vadd.f32 0.0, %v282
        %v284 = vpop.f32.mrf.mxu0
        %285 = vdwg.mxu0
        %v286 = vpack.c.bf16 %v225, %v225
        %v287 = vpack.c.bf16 %v254, %v254
        %vm288 = vcmask 130048
        %v290 = vsel %vm288, %v286, 0
        %v293 = vsel %vm288, %v287, 0
        %295 = vmatpush.bf16.xpose.msra.mxu0 0
        %296 = vmatpush.bf16.xpose.msra.mxu0 0
        %297 = vmatpush.bf16.xpose.msra.mxu0 0
        %298 = vmatpush.bf16.xpose.msra.mxu0 0
        %299 = vmatpush.bf16.xpose.msra.mxu0 0
        %300 = vmatpush.bf16.xpose.msra.mxu0 0
        %301 = vmatpush.bf16.xpose.msra.mxu0 0
        %302 = vmatpush.bf16.xpose.msra.mxu0 %v293
        %303 = vmatmul.bf16.gmra.mxu0 %v290
        %v304 = vpop.f32.mrf.mxu0
        %v305 = vadd.f32 0.0, %v304
        %v306 = vpop.f32.mrf.mxu0
        %307 = vdwg.mxu0
        %vm308 = vcmask 64512
        %v309 = vsel %vm308, %v305, -inf
        %310 = vmax.xlane.f32.xlu0 %v309
        %v311 = vpop.xlane.xlu0 %310
        %v312 = vsub.f32 %v305, %v311
        %v313 = vmul.f32 %v312, 1.442695
        %v314 = vpow.pop %v313
        %v315 = vsel %vm308, %v314, 0.0
        %316 = vadd.xlane.f32.xlu0 %v315
        %v317 = vpop.xlane.xlu0 %316
        %v318 = vpack.c.bf16 %v314, %v314
        %v319 = vpack.c.bf16 %v283, %v283
        %v321 = vsel %vm308, %v318, 0
        %vm323 = vcmask 1043456
        %v325 = vsel %vm323, %v319, 0
        %327 = vmatpush.bf16.msra.mxu0 0
        %328 = vmatpush.bf16.msra.mxu0 0
        %329 = vmatpush.bf16.msra.mxu0 0
        %330 = vmatpush.bf16.msra.mxu0 0
        %331 = vmatpush.bf16.msra.mxu0 0
        %332 = vmatpush.bf16.msra.mxu0 0
        %333 = vmatpush.bf16.msra.mxu0 0
        %334 = vmatpush.bf16.msra.mxu0 %v325
        %335 = vmatmul.bf16.gmra.mxu0 %v321
        %v336 = vpop.f32.mrf.mxu0
        %v337 = vadd.f32 0.0, %v336
        %v338 = vpop.f32.mrf.mxu0
        %339 = vdwg.mxu0
        %v340 = vrcp.pop %v317
        %v341 = vmul.f32 %v337, %v340
        %342 = vst.msk [vmem:[%s188] sm:$0xff] %vm288, %v341
        %s343 = sand.u32 %s115, 1
        %s344 = scalar_lea.sflag [#allocation3], %s343
        %s345 = sand.u32 %s115, 1
        %s346 = smul.addr %s345, 8
        %s347 = scalar_lea.vmem [#allocation2], %s346
        // Predicated region
        $region37: #{head_forward.1} parent=35 // pred_check
          %p348 = pneg %p125
        $region38: #{head_forward.1} parent=35 // pred_check_branch
          %350 = sbr.rel (%p348) target = $region40
        $region39: #{head_forward.1} parent=35 // pred_region
          %352 = vsyncadd %s344, 0
          %s353 = smul.addr %s18, 8
          %s354 = scalar_lea.hbm %s4, %s353
          %s356 = sshll.u32 %s347, 4
          %s357 = int_to_ptr.vmem [resolvable:$true] %s356
          %s358 = sshll.u32 %s354, 4
          %s359 = int_to_ptr.hbm [resolvable:$true] %s358
          %361 = dma.vmem_to_hbm [thread:$0]  %s357, 128, %s359, %s344
        $region40: #{head_forward.1} parent=35 // pred_fallthru
          _
      $region36: #{head_forward.1} parent=5 // pred_fallthru
        _
      %p362 = scmp.le.s32.totalorder 2, %s13
      // Predicated region
      $region41: #{head_forward.1} parent=5 // pred_check
        %p363 = pneg %p362
      $region42: #{head_forward.1} parent=5 // pred_check_branch
        %365 = sbr.rel (%p363) target = $region44
      $region43: #{head_forward.1} parent=5 // pred_region
        %s366 = ssub.s32 %s13, 2
        // Predicated region
        $region45: #{head_forward.1} parent=43 // pred_check
          %p367 = pneg %p131
        $region46: #{head_forward.1} parent=43 // pred_check_branch
          %369 = sbr.rel (%p367) target = $region48
        $region47: #{head_forward.1} parent=43 // pred_region
          %s370 = sand.u32 %s116, 1
          %s371 = scalar_lea.sflag [#allocation3], %s370
          %s372 = sand.u32 %s116, 1
          %s373 = smul.addr %s372, 8
          %s374 = scalar_lea.vmem [#allocation2], %s373
          %376 = dma.done %s371, 128
        $region48: #{head_forward.1} parent=43 // pred_fallthru
          _
      $region44: #{head_forward.1} parent=5 // pred_fallthru
        _
    $region6: #{head_forward.1} parent=1 // loop_footer
      %s17 = sadd.s32 1, %s13
    $region7: #{head_forward.1} parent=1 // loop_footer_branch
      %12 = sbr.rel target = $region3
    $region8: #{head_forward.1} parent=1 // loop_exit
      _
    %377 = vsyncpa [#allocation3], 1
    %s378 = scalar_lea.sflag [#allocation3], 1
    %379 = vsyncpa %s378, 1

</llo_original>
